<compile_context>
chip_gen: v5e
topology: v5e:2x2
jax: 0.10.0
libtpu: 0.0.40
codegen_flags: <defaults>
</compile_context>

<pallas_src>
import numpy as np
import jax
import jax.numpy as jnp
from jax.experimental import pallas as pl
from jax.experimental.pallas import tpu as pltpu


def _fc1_kernel(x_ref,     # (TM, TK)  token tile of the input
                w_ref,     # (TK, TN)  weight tile (already transposed: in x out)
                b_ref,     # (1,  TN)  bias tile
                o_ref,     # (TM, TN)  output tile
                acc_ref):  # VMEM (TM, TN) f32 accumulator
    k = pl.program_id(2)

    @pl.when(k == 0)
    def _():
        acc_ref[...] = jnp.zeros_like(acc_ref)

    acc_ref[...] += jnp.dot(x_ref[...], w_ref[...],
                            preferred_element_type=jnp.float32)

    @pl.when(k == pl.num_programs(2) - 1)
    def _():
        o_ref[...] = (acc_ref[...] + b_ref[...].astype(jnp.float32)).astype(o_ref.dtype)


def _fc1(x2d, w_t, bias_2d, *, tm=256, tn=128, tk=128):
    """y = x2d @ w_t + bias, tiled for the MXU.

    x2d:     (M, K)  tokens x hidden_in
    w_t:     (K, N)  fc1.weight.T  (hidden_in x hidden_out)
    bias_2d: (1, N)
    """
    m, k_dim = x2d.shape
    n = w_t.shape[1]

    # Tile sizes: big token tiles amortize per-grid-step overhead; hidden dim
    # stays lane-dense (multiple of 128, or the full dim when it is smaller).
    tm = min(tm, m)
    tn = min(tn, n)
    tk = min(tk, k_dim)
    assert n % tn == 0 and k_dim % tk == 0, "hidden size must be a multiple of 128 (or <=128)"

    # Pad the token axis to a tile multiple so output stores stay unmasked.
    m_pad = pl.cdiv(m, tm) * tm
    if m_pad != m:
        x2d = jnp.pad(x2d, ((0, m_pad - m), (0, 0)))

    grid = (m_pad // tm, n // tn, k_dim // tk)

    out = pl.pallas_call(
        _fc1_kernel,
        out_shape=jax.ShapeDtypeStruct((m_pad, n), x2d.dtype),
        grid_spec=pltpu.PrefetchScalarGridSpec(
            num_scalar_prefetch=0,
            grid=grid,
            in_specs=[
                pl.BlockSpec((tm, tk), lambda i, j, kk: (i, kk)),   # x tile
                pl.BlockSpec((tk, tn), lambda i, j, kk: (kk, j)),   # w tile
                pl.BlockSpec((1, tn),  lambda i, j, kk: (0, j)),    # bias tile
            ],
            out_specs=pl.BlockSpec((tm, tn), lambda i, j, kk: (i, j)),
            scratch_shapes=[pltpu.VMEM((tm, tn), jnp.float32)],
        ),
        # M / N tiles are independent -> "parallel" (lets v7x's 2 TCs split the
        # grid); K is the accumulation axis -> last + "arbitrary".
        # NOTE: for production tile sizes raise vmem_limit_bytes here (keep
        # headroom: 128 MiB VMEM on v5e/v6e, 64 MiB on v7x).
        compiler_params=pltpu.CompilerParams(
            dimension_semantics=("parallel", "parallel", "arbitrary")),
    )(x2d, w_t, bias_2d)
    return out[:m]


def layer1_forward(x, fc1_weight, fc1_bias, *, tm=256, tn=128, tk=128):
    """Forward of Layer1: all-to-all -> stash('1to3', input) -> fc1(input).

    x:          (B, S, H)
    fc1_weight: (H_out, H_in)   PyTorch nn.Linear weight layout
    fc1_bias:   (H_out,)
    Returns (fc1_out, stashed) where `stashed` is the post-all-to-all input
    that the '1to3' pipeline skip connection carries to a later layer.
    """
    # TODO(synk): _AllToAll.apply(self.pg, input) is a multi-process collective;
    # with a single device / process-group of size 1 it is the identity, so it
    # is applied as identity here (a real mesh would use
    # pltpu.make_async_remote_copy per peer).
    x_a2a = x
    stashed = x_a2a  # stash('1to3', input): returned as a second output.

    b, s, h = x_a2a.shape
    x2d = x_a2a.reshape(b * s, h)
    w_t = fc1_weight.T                      # (H_in, H_out): y = x @ W.T + b
    out2d = _fc1(x2d, w_t, fc1_bias.reshape(1, -1), tm=tm, tn=tn, tk=tk)
    return out2d.reshape(b, s, -1), stashed


if __name__ == "__main__":
    key = jax.random.PRNGKey(0)

    # Small shapes consistent with the module (hidden_size on the lane axis).
    batch, seq, hidden = 2, 64, 256
    k1, k2, k3 = jax.random.split(key, 3)

    x = jax.random.normal(k1, (batch, seq, hidden), jnp.float32)
    fc1_weight = jax.random.normal(k2, (hidden, hidden), jnp.float32) / float(np.sqrt(hidden))
    fc1_bias = jax.random.normal(k3, (hidden,), jnp.float32)

    out, stashed = layer1_forward(x, fc1_weight, fc1_bias)
    out = jax.block_until_ready(out)
    stashed = jax.block_until_ready(stashed)

    # Reference (float64 numpy) of the PyTorch forward semantics.
    x_np = np.asarray(x, dtype=np.float64).reshape(-1, hidden)
    w_np = np.asarray(fc1_weight, dtype=np.float64)
    b_np = np.asarray(fc1_bias, dtype=np.float64)
    ref = (x_np @ w_np.T + b_np).reshape(batch, seq, hidden)

    # Loose tolerance: the MXU's default f32 matmul precision (bf16 input
    # passes, f32 accumulate) matches PyTorch-on-TPU / XLA default behavior.
    np.testing.assert_allclose(np.asarray(out), ref, rtol=5e-2, atol=5e-2)
    np.testing.assert_allclose(np.asarray(stashed), np.asarray(x), rtol=0, atol=0)
    print("KERNEL_OK")
</pallas_src>

<mosaic_0001>
module attributes {stable_mosaic.version = 11 : i64} {
  func.func @_fc1_kernel(%arg0: i32, %arg1: i32, %arg2: i32, %arg3: memref<128x128xf32, #tpu.memory_space<vmem>>, %arg4: memref<128x128xf32, #tpu.memory_space<vmem>>, %arg5: memref<1x128xf32, #tpu.memory_space<vmem>>, %arg6: memref<128x128xf32, #tpu.memory_space<vmem>>, %arg7: memref<128x128xf32, #tpu.memory_space<vmem>>) attributes {dimension_semantics = [#tpu.dimension_semantics<parallel>, #tpu.dimension_semantics<parallel>, #tpu.dimension_semantics<arbitrary>], iteration_bounds = array<i64: 1, 2, 2>, scalar_prefetch = 0 : i64, scratch_operands = 1 : i64, tpu.core_type = #tpu.core_type<tc>, window_params = [{transform_indices = @transform_0, window_bounds = array<i64: 128, 128>}, {transform_indices = @transform_1, window_bounds = array<i64: 128, 128>}, {transform_indices = @transform_2, window_bounds = array<i64: 1, 128>}, {transform_indices = @transform_3, window_bounds = array<i64: 128, 128>}]} {
    %c0_i32 = arith.constant 0 : i32
    %0 = arith.cmpi eq, %arg2, %c0_i32 : i32
    %1 = arith.extui %0 : i1 to i32
    %c0_i32_0 = arith.constant 0 : i32
    %2 = arith.cmpi ne, %1, %c0_i32_0 : i32
    scf.if %2 {
      %cst_9 = arith.constant 0.000000e+00 : f32
      %12 = vector.broadcast %cst_9 : f32 to vector<128x128xf32>
      %c0_10 = arith.constant 0 : index
      %c0_11 = arith.constant 0 : index
      %13 = vector.load %arg7[%c0_10, %c0_11] : memref<128x128xf32, #tpu.memory_space<vmem>>, vector<128x128xf32>
      tpu.vector_store %arg7[%c0_10, %c0_11], %12 {strides = array<i32>} : memref<128x128xf32, #tpu.memory_space<vmem>>, vector<128x128xf32>,
    } else {
    }
    %c0 = arith.constant 0 : index
    %c0_1 = arith.constant 0 : index
    %3 = vector.load %arg7[%c0, %c0_1] : memref<128x128xf32, #tpu.memory_space<vmem>>, vector<128x128xf32>
    %c0_2 = arith.constant 0 : index
    %c0_3 = arith.constant 0 : index
    %4 = vector.load %arg3[%c0_2, %c0_3] : memref<128x128xf32, #tpu.memory_space<vmem>>, vector<128x128xf32>
    %c0_4 = arith.constant 0 : index
    %c0_5 = arith.constant 0 : index
    %5 = vector.load %arg4[%c0_4, %c0_5] : memref<128x128xf32, #tpu.memory_space<vmem>>, vector<128x128xf32>
    %cst = arith.constant dense<0.000000e+00> : vector<128x128xf32>
    %6 = tpu.matmul %4, %5, %cst {dimension_numbers = #tpu.dot_dimension_numbers<[1], [0], [0], [1], [0, 0, 1, 1], [], []>} : vector<128x128xf32>, vector<128x128xf32>, vector<128x128xf32> -> vector<128x128xf32>
    %7 = arith.addf %3, %6 : vector<128x128xf32>
    %c0_6 = arith.constant 0 : index
    %c0_7 = arith.constant 0 : index
    %8 = vector.load %arg7[%c0_6, %c0_7] : memref<128x128xf32, #tpu.memory_space<vmem>>, vector<128x128xf32>
    tpu.vector_store %arg7[%c0_6, %c0_7], %7 {strides = array<i32>} : memref<128x128xf32, #tpu.memory_space<vmem>>, vector<128x128xf32>,
    %c1_i32 = arith.constant 1 : i32
    %9 = arith.cmpi eq, %arg2, %c1_i32 : i32
    %10 = arith.extui %9 : i1 to i32
    %c0_i32_8 = arith.constant 0 : i32
    %11 = arith.cmpi ne, %10, %c0_i32_8 : i32
    scf.if %11 {
      %c0_9 = arith.constant 0 : index
      %c0_10 = arith.constant 0 : index
      %12 = vector.load %arg7[%c0_9, %c0_10] : memref<128x128xf32, #tpu.memory_space<vmem>>, vector<128x128xf32>
      %c0_11 = arith.constant 0 : index
      %c0_12 = arith.constant 0 : index
      %13 = vector.load %arg5[%c0_11, %c0_12] : memref<1x128xf32, #tpu.memory_space<vmem>>, vector<1x128xf32>
      %14 = vector.broadcast %13 : vector<1x128xf32> to vector<128x128xf32>
      %15 = arith.addf %12, %14 : vector<128x128xf32>
      %c0_13 = arith.constant 0 : index
      %c0_14 = arith.constant 0 : index
      %16 = vector.load %arg6[%c0_13, %c0_14] : memref<128x128xf32, #tpu.memory_space<vmem>>, vector<128x128xf32>
      tpu.vector_store %arg6[%c0_13, %c0_14], %15 {strides = array<i32>} : memref<128x128xf32, #tpu.memory_space<vmem>>, vector<128x128xf32>,
    } else {
    }
    return
  }
  func.func @transform_0(%arg0: i32, %arg1: i32, %arg2: i32) -> (i32, i32) {
    %c0_i32 = arith.constant 0 : i32
    return %arg0, %arg2 : i32, i32
  }
  func.func @transform_1(%arg0: i32, %arg1: i32, %arg2: i32) -> (i32, i32) {
    %c0_i32 = arith.constant 0 : i32
    return %arg2, %arg1 : i32, i32
  }
  func.func @transform_2(%arg0: i32, %arg1: i32, %arg2: i32) -> (i32, i32) {
    %c0_i32 = arith.constant 0 : i32
    %c0_i32_0 = arith.constant 0 : i32
    return %c0_i32, %arg1 : i32, i32
  }
  func.func @transform_3(%arg0: i32, %arg1: i32, %arg2: i32) -> (i32, i32) {
    %c0_i32 = arith.constant 0 : i32
    return %arg0, %arg1 : i32, i32
  }
}

</mosaic_0001>

<llo_original>
// kernel: tpu_custom_call.1
$region0: #{tpu_custom_call.1}
  #allocation0 [shape = 'u32[]', space=smem, size = 0x4, offset = 0x4, fixed_abs, tag = 'smem constant byte address 0x4 - core index']
  #allocation1 [shape = 'u32[72,128]{1,0:T(1,128)}', space=vmem, size = 0x9000, scoped, tag = 'internal scratch']
  #allocation2 [shape = 'f32[128,128]{1,0:T(8,128)}', space=vmem, size = 0x10000, scoped, tag = 'scratch operand']
  %s0 = inlined_call_operand.hbm [shape: f32[128,256], index: 0, kind: input, shape index: {}]
  %s1 = inlined_call_operand.hbm [shape: f32[256,256], index: 1, kind: input, shape index: {}]
  %s2 = inlined_call_operand.hbm [shape: f32[1,256], index: 2, kind: input, shape index: {}]
  %s3 = inlined_call_operand.hbm [shape: f32[128,256], index: 3, kind: output, shape index: {}]
  %s4 = sld [smem:[#allocation0]]
  $region65: #{tpu_custom_call.1} parent=0
    _
  %s6 = ssub.s32 1, %s4
  %s7 = scalar_select 0, %s6, %s4
  $region1: #{tpu_custom_call.1} parent=0
    #allocation3 [shape = 'u8[131072]{0}', space=vmem, size = 0x20000, scoped, tag = 'input window, operand 0']
    #allocation4 [shape = 's32[2]{0}', space=sflag, size = 0x8, scoped, tag = 'scoped memory for tpu_custom_call.1']
    #allocation5 [shape = 's32[2]{0}', space=sflag, size = 0x8, scoped, tag = 'scoped memory for tpu_custom_call.1']
    #allocation6 [shape = 'u8[131072]{0}', space=vmem, size = 0x20000, scoped, tag = 'input window, operand 1']
    #allocation7 [shape = 's32[2]{0}', space=sflag, size = 0x8, scoped, tag = 'scoped memory for tpu_custom_call.1']
    #allocation8 [shape = 'u8[1024]{0}', space=vmem, size = 0x400, scoped, tag = 'input window, operand 2']
    #allocation9 [shape = 'u8[131072]{0}', space=vmem, size = 0x20000, scoped, tag = 'output window, operand 0']
    %8 = vsyncpa [#allocation4], 0
    %s9 = scalar_lea.sflag [#allocation4], 1
    %10 = vsyncpa %s9, 0
    %11 = vsyncpa [#allocation7], 0
    %s12 = scalar_lea.sflag [#allocation7], 1
    %13 = vsyncpa %s12, 0
    %14 = vsyncpa [#allocation5], 0
    %s15 = scalar_lea.sflag [#allocation5], 1
    %16 = vsyncpa %s15, 0
    loop: start=0, step=1, limit=6
    $region2: #{tpu_custom_call.1} parent=1 // loop_pre_header
      _
    $region3: #{tpu_custom_call.1} parent=1 // loop_header
      %s18 = sphi 0, %s22
      %p19 = scmp.ge.s32.totalorder %s18, 6
      %s25 = sphi 0, %s44
      %s26 = sphi 0, %s40
      %s27 = sphi 0, %s36
      %s28 = sphi 0, %s25
      %s29 = sphi 0, %s26
      %s30 = sphi 0, %s27
      %s31 = sphi 0, %s28
      %s32 = sphi 0, %s29
      %s33 = sphi 0, %s30
      %s49 = sphi 0, %s51
      %s52 = sphi 0, %s49
      %s53 = sphi 0, %s52
      %s69 = sphi 0, %s53
      %s77 = sphi 0, %s79
      %s80 = sphi 0, %s77
      %s81 = sphi 0, %s80
      %s97 = sphi 0, %s81
      %s103 = sphi 0, %s105
      %s106 = sphi 0, %s103
      %s107 = sphi 0, %s106
      %s123 = sphi 0, %s107
      %s131 = sphi 0, %s133
      %s134 = sphi 0, %s131
      %s135 = sphi 0, %s134
      %s151 = sphi 0, %s135
    $region4: #{tpu_custom_call.1} parent=1 // loop_header_branch
      %21 = sbr.rel (%p19) target = $region8
    $region5: #{tpu_custom_call.1} parent=1 // loop_body
      %s23 = ssub.s32 %s18, 1
      %s24 = ssub.s32 %s18, 2
      %s34 = sadd.s32 1, %s27
      %p35 = scmp.ge.s32.totalorder %s34, 2
      %s36 = scalar_select %p35, 0, %s34
      %s37 = sadd.s32 1, %s26
      %s38 = scalar_select %p35, %s37, %s26
      %p39 = scmp.ge.s32.totalorder %s38, 2
      %s40 = scalar_select %p39, 0, %s38
      %s41 = sadd.s32 1, %s25
      %s42 = scalar_select %p39, %s41, %s25
      %p43 = scmp.ge.s32.totalorder %s42, 1
      %s44 = scalar_select %p43, 0, %s42
      %s45 = ssub.s32 %s25, %s44
      %s46 = ssub.s32 %s27, %s36
      %s47 = sor.u32 %s45, %s46
      %p48 = scmp.eq.s32.totalorder %s47, 0
      %s50 = sadd.s32 %s49, 1
      %s51 = scalar_select %p48, %s49, %s50
      %p54 = pneg %p48
      %p55 = scmp.eq.s32.totalorder %s18, 3
      %p56 = por %p54, %p55
      %p57 = scmp.ne.s32.totalorder %s49, %s52
      %p58 = scmp.eq.s32.totalorder %s18, 0
      %p59 = por %p57, %p58
      %p60 = scmp.ne.s32.totalorder %s49, %s52
      %p61 = scmp.eq.s32.totalorder %s23, 3
      %p62 = por %p60, %p61
      %p63 = scmp.ne.s32.totalorder %s52, %s53
      %p64 = scmp.eq.s32.totalorder %s23, 0
      %p65 = por %p63, %p64
      %p66 = scmp.ne.s32.totalorder %s52, %s53
      %p67 = scmp.eq.s32.totalorder %s24, 3
      %p68 = por %p66, %p67
      %p70 = scmp.ne.s32.totalorder %s53, %s69
      %p71 = scmp.eq.s32.totalorder %s24, 0
      %p72 = por %p70, %p71
      %s73 = ssub.s32 %s27, %s36
      %s74 = ssub.s32 %s26, %s40
      %s75 = sor.u32 %s73, %s74
      %p76 = scmp.eq.s32.totalorder %s75, 0
      %s78 = sadd.s32 %s77, 1
      %s79 = scalar_select %p76, %s77, %s78
      %p82 = pneg %p76
      %p83 = scmp.eq.s32.totalorder %s18, 3
      %p84 = por %p82, %p83
      %p85 = scmp.ne.s32.totalorder %s77, %s80
      %p86 = scmp.eq.s32.totalorder %s18, 0
      %p87 = por %p85, %p86
      %p88 = scmp.ne.s32.totalorder %s77, %s80
      %p89 = scmp.eq.s32.totalorder %s23, 3
      %p90 = por %p88, %p89
      %p91 = scmp.ne.s32.totalorder %s80, %s81
      %p92 = scmp.eq.s32.totalorder %s23, 0
      %p93 = por %p91, %p92
      %p94 = scmp.ne.s32.totalorder %s80, %s81
      %p95 = scmp.eq.s32.totalorder %s24, 3
      %p96 = por %p94, %p95
      %p98 = scmp.ne.s32.totalorder %s81, %s97
      %p99 = scmp.eq.s32.totalorder %s24, 0
      %p100 = por %p98, %p99
      %s101 = ssub.s32 %s26, %s40
      %p102 = scmp.eq.s32.totalorder %s101, 0
      %s104 = sadd.s32 %s103, 1
      %s105 = scalar_select %p102, %s103, %s104
      %p108 = pneg %p102
      %p109 = scmp.eq.s32.totalorder %s18, 3
      %p110 = por %p108, %p109
      %p111 = scmp.ne.s32.totalorder %s103, %s106
      %p112 = scmp.eq.s32.totalorder %s18, 0
      %p113 = por %p111, %p112
      %p114 = scmp.ne.s32.totalorder %s103, %s106
      %p115 = scmp.eq.s32.totalorder %s23, 3
      %p116 = por %p114, %p115
      %p117 = scmp.ne.s32.totalorder %s106, %s107
      %p118 = scmp.eq.s32.totalorder %s23, 0
      %p119 = por %p117, %p118
      %p120 = scmp.ne.s32.totalorder %s106, %s107
      %p121 = scmp.eq.s32.totalorder %s24, 3
      %p122 = por %p120, %p121
      %p124 = scmp.ne.s32.totalorder %s107, %s123
      %p125 = scmp.eq.s32.totalorder %s24, 0
      %p126 = por %p124, %p125
      %s127 = ssub.s32 %s25, %s44
      %s128 = ssub.s32 %s26, %s40
      %s129 = sor.u32 %s127, %s128
      %p130 = scmp.eq.s32.totalorder %s129, 0
      %s132 = sadd.s32 %s131, 1
      %s133 = scalar_select %p130, %s131, %s132
      %p136 = pneg %p130
      %p137 = scmp.eq.s32.totalorder %s18, 3
      %p138 = por %p136, %p137
      %p139 = scmp.ne.s32.totalorder %s131, %s134
      %p140 = scmp.eq.s32.totalorder %s18, 0
      %p141 = por %p139, %p140
      %p142 = scmp.ne.s32.totalorder %s131, %s134
      %p143 = scmp.eq.s32.totalorder %s23, 3
      %p144 = por %p142, %p143
      %p145 = scmp.ne.s32.totalorder %s134, %s135
      %p146 = scmp.eq.s32.totalorder %s23, 0
      %p147 = por %p145, %p146
      %p148 = scmp.ne.s32.totalorder %s134, %s135
      %p149 = scmp.eq.s32.totalorder %s24, 3
      %p150 = por %p148, %p149
      %p152 = scmp.ne.s32.totalorder %s135, %s151
      %p153 = scmp.eq.s32.totalorder %s24, 0
      %p154 = por %p152, %p153
      %p155 = scmp.le.s32.totalorder 1, %s18
      %p156 = scmp.lt.s32.totalorder %s18, 5
      %p157 = pnand %p155, %p156
      %p158 = pneg %p157
      // Predicated region
      $region9: #{tpu_custom_call.1} parent=5 // pred_check
        _
      $region10: #{tpu_custom_call.1} parent=5 // pred_check_branch
        %160 = sbr.rel (%p157) target = $region12
      $region11: #{tpu_custom_call.1} parent=5 // pred_region
        %s161 = ssub.s32 %s18, 1
      $region12: #{tpu_custom_call.1} parent=5 // pred_fallthru
        _
      %p162 = scmp.lt.s32.totalorder %s18, 4
      // Predicated region
      $region13: #{tpu_custom_call.1} parent=5 // pred_check
        %p163 = pneg %p162
      $region14: #{tpu_custom_call.1} parent=5 // pred_check_branch
        %165 = sbr.rel (%p163) target = $region16
      $region15: #{tpu_custom_call.1} parent=5 // pred_region
        // Predicated region
        $region17: #{tpu_custom_call.1} parent=15 // pred_check
          %p166 = pneg %p59
        $region18: #{tpu_custom_call.1} parent=15 // pred_check_branch
          %168 = sbr.rel (%p166) target = $region20
        $region19: #{tpu_custom_call.1} parent=15 // pred_region
          %s169 = sand.u32 %s49, 1
          %s170 = scalar_lea.sflag [#allocation4], %s169
          %s171 = sand.u32 %s49, 1
          %s172 = smul.addr %s171, 128
          %s173 = scalar_lea.vmem [#allocation3], %s172
          %s174 = smul.u32 16, %s25
          %176 = vsyncadd %s170, 0
          %s177 = smul.addr %s174, 2
          %s178 = sadd.s32 %s27, %s177
          %s179 = smul.addr %s178, 8
          %s180 = scalar_lea.hbm %s0, %s179
          %s181 = sshll.u32 %s180, 4
          %s182 = int_to_ptr.hbm [resolvable:$true] %s181
          %s183 = sshll.u32 %s173, 4
          %s184 = int_to_ptr.vmem [resolvable:$true] %s183
          %189 = dma.hbm_to_vmem [thread:$0]  %s182, 2048, %s184, %s170, 256, 128, 8
        $region20: #{tpu_custom_call.1} parent=15 // pred_fallthru
          _
        // Predicated region
        $region21: #{tpu_custom_call.1} parent=15 // pred_check
          %p190 = pneg %p87
        $region22: #{tpu_custom_call.1} parent=15 // pred_check_branch
          %192 = sbr.rel (%p190) target = $region24
        $region23: #{tpu_custom_call.1} parent=15 // pred_region
          %s193 = sand.u32 %s18, 1
          %s194 = scalar_lea.sflag [#allocation7], %s193
          %s195 = sand.u32 %s77, 1
          %s196 = smul.addr %s195, 128
          %s197 = scalar_lea.vmem [#allocation6], %s196
          %s198 = smul.u32 16, %s27
          %200 = vsyncadd %s194, 0
          %s201 = smul.addr %s198, 2
          %s202 = sadd.s32 %s26, %s201
          %s203 = smul.addr %s202, 8
          %s204 = scalar_lea.hbm %s1, %s203
          %s205 = sshll.u32 %s204, 4
          %s206 = int_to_ptr.hbm [resolvable:$true] %s205
          %s207 = sshll.u32 %s197, 4
          %s208 = int_to_ptr.vmem [resolvable:$true] %s207
          %213 = dma.hbm_to_vmem [thread:$0]  %s206, 2048, %s208, %s194, 256, 128, 8
        $region24: #{tpu_custom_call.1} parent=15 // pred_fallthru
          _
        // Predicated region
        $region25: #{tpu_custom_call.1} parent=15 // pred_check
          %p214 = pneg %p113
        $region26: #{tpu_custom_call.1} parent=15 // pred_check_branch
          %216 = sbr.rel (%p214) target = $region28
        $region27: #{tpu_custom_call.1} parent=15 // pred_region
          %s217 = sand.u32 %s18, 1
          %s218 = scalar_lea.sflag [#allocation7], %s217
          %s219 = sand.u32 %s103, 1
          %s220 = scalar_lea.vmem [#allocation8], %s219
          %222 = vsyncadd %s218, 0
          %s223 = scalar_lea.hbm %s2, %s26
          %s225 = sshll.u32 %s223, 4
          %s226 = int_to_ptr.hbm [resolvable:$true] %s225
          %s227 = sshll.u32 %s220, 4
          %s228 = int_to_ptr.vmem [resolvable:$true] %s227
          %230 = dma.hbm_to_vmem [thread:$0]  %s226, 16, %s228, %s218
        $region28: #{tpu_custom_call.1} parent=15 // pred_fallthru
          _
      $region16: #{tpu_custom_call.1} parent=5 // pred_fallthru
        _
      %p231 = scmp.le.s32.totalorder 1, %s18
      %p232 = scmp.lt.s32.totalorder %s18, 5
      %p233 = pnand %p231, %p232
      %p234 = pneg %p233
      // Predicated region
      $region29: #{tpu_custom_call.1} parent=5 // pred_check
        _
      $region30: #{tpu_custom_call.1} parent=5 // pred_check_branch
        %236 = sbr.rel (%p233) target = $region32
      $region31: #{tpu_custom_call.1} parent=5 // pred_region
        %s237 = ssub.s32 %s18, 1
        %s238 = sand.u32 %s52, 1
        %s239 = scalar_lea.sflag [#allocation4], %s238
        %s240 = sand.u32 %s52, 1
        %s241 = smul.addr %s240, 128
        %s242 = scalar_lea.vmem [#allocation3], %s241
        // Predicated region
        $region33: #{tpu_custom_call.1} parent=31 // pred_check
          %p243 = pneg %p65
        $region34: #{tpu_custom_call.1} parent=31 // pred_check_branch
          %245 = sbr.rel (%p243) target = $region36
        $region35: #{tpu_custom_call.1} parent=31 // pred_region
          %247 = dma.done %s239, 2048
        $region36: #{tpu_custom_call.1} parent=31 // pred_fallthru
          _
        %s248 = sand.u32 %s23, 1
        %s249 = scalar_lea.sflag [#allocation7], %s248
        %s250 = sand.u32 %s80, 1
        %s251 = smul.addr %s250, 128
        %s252 = scalar_lea.vmem [#allocation6], %s251
        // Predicated region
        $region37: #{tpu_custom_call.1} parent=31 // pred_check
          %p253 = pneg %p93
        $region38: #{tpu_custom_call.1} parent=31 // pred_check_branch
          %255 = sbr.rel (%p253) target = $region40
        $region39: #{tpu_custom_call.1} parent=31 // pred_region
          %257 = dma.done %s249, 2048
        $region40: #{tpu_custom_call.1} parent=31 // pred_fallthru
          _
        %s258 = sand.u32 %s23, 1
        %s259 = scalar_lea.sflag [#allocation7], %s258
        %s260 = sand.u32 %s106, 1
        %s261 = scalar_lea.vmem [#allocation8], %s260
        // Predicated region
        $region41: #{tpu_custom_call.1} parent=31 // pred_check
          %p262 = pneg %p119
        $region42: #{tpu_custom_call.1} parent=31 // pred_check_branch
          %264 = sbr.rel (%p262) target = $region44
        $region43: #{tpu_custom_call.1} parent=31 // pred_region
          %266 = dma.done %s259, 16
        $region44: #{tpu_custom_call.1} parent=31 // pred_fallthru
          _
        %s267 = sand.u32 %s52, 1
        %s268 = scalar_lea.sflag [#allocation4], %s267
        %s269 = sand.u32 %s52, 1
        %s270 = smul.addr %s269, 128
        %s271 = scalar_lea.vmem [#allocation3], %s270
        %p272 = pneg %p65
        %p273 = pneg %p62
        %s274 = sand.u32 %s23, 1
        %s275 = scalar_lea.sflag [#allocation7], %s274
        %s276 = sand.u32 %s80, 1
        %s277 = smul.addr %s276, 128
        %s278 = scalar_lea.vmem [#allocation6], %s277
        %p279 = pneg %p93
        %p280 = pneg %p90
        %s281 = sand.u32 %s23, 1
        %s282 = scalar_lea.sflag [#allocation7], %s281
        %s283 = sand.u32 %s106, 1
        %s284 = scalar_lea.vmem [#allocation8], %s283
        %p285 = pneg %p119
        %p286 = pneg %p116
        %p287 = pneg %p147
        %p288 = pneg %p144
        %s289 = sand.u32 %s134, 1
        %s290 = scalar_lea.sflag [#allocation5], %s289
        %s291 = sand.u32 %s134, 1
        %s292 = smul.addr %s291, 128
        %s293 = scalar_lea.vmem [#allocation9], %s292
        %s294 = smul.u32 16, %s28
        %s295 = smul.u32 16, %s30
        %s296 = smul.u32 16, %s28
        %p297 = scmp.eq.s32.totalorder %s30, 0
        // Predicated region
        $region45: #{tpu_custom_call.1} parent=31 // pred_check
          %p298 = pneg %p297
        $region46: #{tpu_custom_call.1} parent=31 // pred_check_branch
          %300 = sbr.rel (%p298) target = $region48
        $region47: #{tpu_custom_call.1} parent=31 // pred_region
          %301 = vst [vmem:[#allocation2] sm:$0xff] 0.0
          %302 = vst [vmem:[#allocation2 + $0x8] sm:$0xff] 0.0
          %303 = vst [vmem:[#allocation2 + $0x10] sm:$0xff] 0.0
          %304 = vst [vmem:[#allocation2 + $0x18] sm:$0xff] 0.0
          %305 = vst [vmem:[#allocation2 + $0x20] sm:$0xff] 0.0
          %306 = vst [vmem:[#allocation2 + $0x28] sm:$0xff] 0.0
          %307 = vst [vmem:[#allocation2 + $0x30] sm:$0xff] 0.0
          %308 = vst [vmem:[#allocation2 + $0x38] sm:$0xff] 0.0
          %309 = vst [vmem:[#allocation2 + $0x40] sm:$0xff] 0.0
          %310 = vst [vmem:[#allocation2 + $0x48] sm:$0xff] 0.0
          %311 = vst [vmem:[#allocation2 + $0x50] sm:$0xff] 0.0
          %312 = vst [vmem:[#allocation2 + $0x58] sm:$0xff] 0.0
          %313 = vst [vmem:[#allocation2 + $0x60] sm:$0xff] 0.0
          %314 = vst [vmem:[#allocation2 + $0x68] sm:$0xff] 0.0
          %315 = vst [vmem:[#allocation2 + $0x70] sm:$0xff] 0.0
          %316 = vst [vmem:[#allocation2 + $0x78] sm:$0xff] 0.0
        $region48: #{tpu_custom_call.1} parent=31 // pred_fallthru
          _
        %v317 = vld [vmem:[#allocation2] sm:$0xff]
        %v318 = vld [vmem:[#allocation2 + $0x8] sm:$0xff]
        %v319 = vld [vmem:[#allocation2 + $0x10] sm:$0xff]
        %v320 = vld [vmem:[#allocation2 + $0x18] sm:$0xff]
        %v321 = vld [vmem:[#allocation2 + $0x20] sm:$0xff]
        %v322 = vld [vmem:[#allocation2 + $0x28] sm:$0xff]
        %v323 = vld [vmem:[#allocation2 + $0x30] sm:$0xff]
        %v324 = vld [vmem:[#allocation2 + $0x38] sm:$0xff]
        %v325 = vld [vmem:[#allocation2 + $0x40] sm:$0xff]
        %v326 = vld [vmem:[#allocation2 + $0x48] sm:$0xff]
        %v327 = vld [vmem:[#allocation2 + $0x50] sm:$0xff]
        %v328 = vld [vmem:[#allocation2 + $0x58] sm:$0xff]
        %v329 = vld [vmem:[#allocation2 + $0x60] sm:$0xff]
        %v330 = vld [vmem:[#allocation2 + $0x68] sm:$0xff]
        %v331 = vld [vmem:[#allocation2 + $0x70] sm:$0xff]
        %v332 = vld [vmem:[#allocation2 + $0x78] sm:$0xff]
        %v333 = vld [vmem:[%s242] sm:$0xff]
        %v334 = vld [vmem:[%s242 + $0x8] sm:$0xff]
        %v335 = vld [vmem:[%s242 + $0x10] sm:$0xff]
        %v336 = vld [vmem:[%s242 + $0x18] sm:$0xff]
        %v337 = vld [vmem:[%s242 + $0x20] sm:$0xff]
        %v338 = vld [vmem:[%s242 + $0x28] sm:$0xff]
        %v339 = vld [vmem:[%s242 + $0x30] sm:$0xff]
        %v340 = vld [vmem:[%s242 + $0x38] sm:$0xff]
        %v341 = vld [vmem:[%s242 + $0x40] sm:$0xff]
        %v342 = vld [vmem:[%s242 + $0x48] sm:$0xff]
        %v343 = vld [vmem:[%s242 + $0x50] sm:$0xff]
        %v344 = vld [vmem:[%s242 + $0x58] sm:$0xff]
        %v345 = vld [vmem:[%s242 + $0x60] sm:$0xff]
        %v346 = vld [vmem:[%s242 + $0x68] sm:$0xff]
        %v347 = vld [vmem:[%s242 + $0x70] sm:$0xff]
        %v348 = vld [vmem:[%s242 + $0x78] sm:$0xff]
        %v349 = vld [vmem:[%s252] sm:$0xff]
        %v350 = vld [vmem:[%s252 + $0x8] sm:$0xff]
        %v351 = vld [vmem:[%s252 + $0x10] sm:$0xff]
        %v352 = vld [vmem:[%s252 + $0x18] sm:$0xff]
        %v353 = vld [vmem:[%s252 + $0x20] sm:$0xff]
        %v354 = vld [vmem:[%s252 + $0x28] sm:$0xff]
        %v355 = vld [vmem:[%s252 + $0x30] sm:$0xff]
        %v356 = vld [vmem:[%s252 + $0x38] sm:$0xff]
        %v357 = vld [vmem:[%s252 + $0x40] sm:$0xff]
        %v358 = vld [vmem:[%s252 + $0x48] sm:$0xff]
        %v359 = vld [vmem:[%s252 + $0x50] sm:$0xff]
        %v360 = vld [vmem:[%s252 + $0x58] sm:$0xff]
        %v361 = vld [vmem:[%s252 + $0x60] sm:$0xff]
        %v362 = vld [vmem:[%s252 + $0x68] sm:$0xff]
        %v363 = vld [vmem:[%s252 + $0x70] sm:$0xff]
        %v364 = vld [vmem:[%s252 + $0x78] sm:$0xff]
        %365 = vmatpush.msra.mxu0 %v364
        %366 = vmatpush.msra.mxu0 %v363
        %367 = vmatpush.msra.mxu0 %v362
        %368 = vmatpush.msra.mxu0 %v361
        %369 = vmatpush.msra.mxu0 %v360
        %370 = vmatpush.msra.mxu0 %v359
        %371 = vmatpush.msra.mxu0 %v358
        %372 = vmatpush.msra.mxu0 %v357
        %373 = vmatpush.msra.mxu0 %v356
        %374 = vmatpush.msra.mxu0 %v355
        %375 = vmatpush.msra.mxu0 %v354
        %376 = vmatpush.msra.mxu0 %v353
        %377 = vmatpush.msra.mxu0 %v352
        %378 = vmatpush.msra.mxu0 %v351
        %379 = vmatpush.msra.mxu0 %v350
        %380 = vmatpush.msra.mxu0 %v349
        %381 = vmatmul.f32.gmra.mxu0 %v333
        %v382 = vpop.f32.mrf.mxu0
        %v383 = vadd.f32 0.0, %v382
        %384 = vmatmul.f32.gmra.mxu0 %v334
        %v385 = vpop.f32.mrf.mxu0
        %v386 = vadd.f32 0.0, %v385
        %387 = vmatmul.f32.gmra.mxu0 %v335
        %v388 = vpop.f32.mrf.mxu0
        %v389 = vadd.f32 0.0, %v388
        %390 = vmatmul.f32.gmra.mxu0 %v336
        %v391 = vpop.f32.mrf.mxu0
        %v392 = vadd.f32 0.0, %v391
        %393 = vmatmul.f32.gmra.mxu0 %v337
        %v394 = vpop.f32.mrf.mxu0
        %v395 = vadd.f32 0.0, %v394
        %396 = vmatmul.f32.gmra.mxu0 %v338
        %v397 = vpop.f32.mrf.mxu0
        %v398 = vadd.f32 0.0, %v397
        %399 = vmatmul.f32.gmra.mxu0 %v339
        %v400 = vpop.f32.mrf.mxu0
        %v401 = vadd.f32 0.0, %v400
        %402 = vmatmul.f32.gmra.mxu0 %v340
        %v403 = vpop.f32.mrf.mxu0
        %v404 = vadd.f32 0.0, %v403
        %405 = vmatmul.f32.gmra.mxu0 %v341
        %v406 = vpop.f32.mrf.mxu0
        %v407 = vadd.f32 0.0, %v406
        %408 = vmatmul.f32.gmra.mxu0 %v342
        %v409 = vpop.f32.mrf.mxu0
        %v410 = vadd.f32 0.0, %v409
        %411 = vmatmul.f32.gmra.mxu0 %v343
        %v412 = vpop.f32.mrf.mxu0
        %v413 = vadd.f32 0.0, %v412
        %414 = vmatmul.f32.gmra.mxu0 %v344
        %v415 = vpop.f32.mrf.mxu0
        %v416 = vadd.f32 0.0, %v415
        %417 = vmatmul.f32.gmra.mxu0 %v345
        %v418 = vpop.f32.mrf.mxu0
        %v419 = vadd.f32 0.0, %v418
        %420 = vmatmul.f32.gmra.mxu0 %v346
        %v421 = vpop.f32.mrf.mxu0
        %v422 = vadd.f32 0.0, %v421
        %423 = vmatmul.f32.gmra.mxu0 %v347
        %v424 = vpop.f32.mrf.mxu0
        %v425 = vadd.f32 0.0, %v424
        %426 = vmatmul.f32.gmra.mxu0 %v348
        %v427 = vpop.f32.mrf.mxu0
        %v428 = vadd.f32 0.0, %v427
        %429 = vdwg.mxu0
        %v430 = vadd.f32 %v317, %v383
        %v431 = vadd.f32 %v318, %v386
        %v432 = vadd.f32 %v319, %v389
        %v433 = vadd.f32 %v320, %v392
        %v434 = vadd.f32 %v321, %v395
        %v435 = vadd.f32 %v322, %v398
        %v436 = vadd.f32 %v323, %v401
        %v437 = vadd.f32 %v324, %v404
        %v438 = vadd.f32 %v325, %v407
        %v439 = vadd.f32 %v326, %v410
        %v440 = vadd.f32 %v327, %v413
        %v441 = vadd.f32 %v328, %v416
        %v442 = vadd.f32 %v329, %v419
        %v443 = vadd.f32 %v330, %v422
        %v444 = vadd.f32 %v331, %v425
        %v445 = vadd.f32 %v332, %v428
        %446 = vst [vmem:[#allocation2] sm:$0xff] %v430
        %447 = vst [vmem:[#allocation2 + $0x8] sm:$0xff] %v431
        %448 = vst [vmem:[#allocation2 + $0x10] sm:$0xff] %v432
        %449 = vst [vmem:[#allocation2 + $0x18] sm:$0xff] %v433
        %450 = vst [vmem:[#allocation2 + $0x20] sm:$0xff] %v434
        %451 = vst [vmem:[#allocation2 + $0x28] sm:$0xff] %v435
        %452 = vst [vmem:[#allocation2 + $0x30] sm:$0xff] %v436
        %453 = vst [vmem:[#allocation2 + $0x38] sm:$0xff] %v437
        %454 = vst [vmem:[#allocation2 + $0x40] sm:$0xff] %v438
        %455 = vst [vmem:[#allocation2 + $0x48] sm:$0xff] %v439
        %456 = vst [vmem:[#allocation2 + $0x50] sm:$0xff] %v440
        %457 = vst [vmem:[#allocation2 + $0x58] sm:$0xff] %v441
        %458 = vst [vmem:[#allocation2 + $0x60] sm:$0xff] %v442
        %459 = vst [vmem:[#allocation2 + $0x68] sm:$0xff] %v443
        %460 = vst [vmem:[#allocation2 + $0x70] sm:$0xff] %v444
        %461 = vst [vmem:[#allocation2 + $0x78] sm:$0xff] %v445
        %p462 = scmp.eq.s32.totalorder %s30, 1
        // Predicated region
        $region49: #{tpu_custom_call.1} parent=31 // pred_check
          %p463 = pneg %p462
        $region50: #{tpu_custom_call.1} parent=31 // pred_check_branch
          %465 = sbr.rel (%p463) target = $region52
        $region51: #{tpu_custom_call.1} parent=31 // pred_region
          %v466 = vld [vmem:[#allocation2] sm:$0xff]
          %v467 = vld [vmem:[#allocation2 + $0x8] sm:$0xff]
          %v468 = vld [vmem:[#allocation2 + $0x10] sm:$0xff]
          %v469 = vld [vmem:[#allocation2 + $0x18] sm:$0xff]
          %v470 = vld [vmem:[#allocation2 + $0x20] sm:$0xff]
          %v471 = vld [vmem:[#allocation2 + $0x28] sm:$0xff]
          %v472 = vld [vmem:[#allocation2 + $0x30] sm:$0xff]
          %v473 = vld [vmem:[#allocation2 + $0x38] sm:$0xff]
          %v474 = vld [vmem:[#allocation2 + $0x40] sm:$0xff]
          %v475 = vld [vmem:[#allocation2 + $0x48] sm:$0xff]
          %v476 = vld [vmem:[#allocation2 + $0x50] sm:$0xff]
          %v477 = vld [vmem:[#allocation2 + $0x58] sm:$0xff]
          %v478 = vld [vmem:[#allocation2 + $0x60] sm:$0xff]
          %v479 = vld [vmem:[#allocation2 + $0x68] sm:$0xff]
          %v480 = vld [vmem:[#allocation2 + $0x70] sm:$0xff]
          %v481 = vld [vmem:[#allocation2 + $0x78] sm:$0xff]
          %v482 = vld [vmem:[%s261] sm:$0x1]
          %v484 = vperm.slane %v482, 0
          %v486 = vadd.f32 %v466, %v484
          %v487 = vadd.f32 %v467, %v484
          %v488 = vadd.f32 %v468, %v484
          %v489 = vadd.f32 %v469, %v484
          %v490 = vadd.f32 %v470, %v484
          %v491 = vadd.f32 %v471, %v484
          %v492 = vadd.f32 %v472, %v484
          %v493 = vadd.f32 %v473, %v484
          %v494 = vadd.f32 %v474, %v484
          %v495 = vadd.f32 %v475, %v484
          %v496 = vadd.f32 %v476, %v484
          %v497 = vadd.f32 %v477, %v484
          %v498 = vadd.f32 %v478, %v484
          %v499 = vadd.f32 %v479, %v484
          %v500 = vadd.f32 %v480, %v484
          %v501 = vadd.f32 %v481, %v484
          %502 = vst [vmem:[%s293] sm:$0xff] %v486
          %503 = vst [vmem:[%s293 + $0x8] sm:$0xff] %v487
          %504 = vst [vmem:[%s293 + $0x10] sm:$0xff] %v488
          %505 = vst [vmem:[%s293 + $0x18] sm:$0xff] %v489
          %506 = vst [vmem:[%s293 + $0x20] sm:$0xff] %v490
          %507 = vst [vmem:[%s293 + $0x28] sm:$0xff] %v491
          %508 = vst [vmem:[%s293 + $0x30] sm:$0xff] %v492
          %509 = vst [vmem:[%s293 + $0x38] sm:$0xff] %v493
          %510 = vst [vmem:[%s293 + $0x40] sm:$0xff] %v494
          %511 = vst [vmem:[%s293 + $0x48] sm:$0xff] %v495
          %512 = vst [vmem:[%s293 + $0x50] sm:$0xff] %v496
          %513 = vst [vmem:[%s293 + $0x58] sm:$0xff] %v497
          %514 = vst [vmem:[%s293 + $0x60] sm:$0xff] %v498
          %515 = vst [vmem:[%s293 + $0x68] sm:$0xff] %v499
          %516 = vst [vmem:[%s293 + $0x70] sm:$0xff] %v500
          %517 = vst [vmem:[%s293 + $0x78] sm:$0xff] %v501
        $region52: #{tpu_custom_call.1} parent=31 // pred_fallthru
          _
        %s518 = sand.u32 %s134, 1
        %s519 = scalar_lea.sflag [#allocation5], %s518
        %s520 = sand.u32 %s134, 1
        %s521 = smul.addr %s520, 128
        %s522 = scalar_lea.vmem [#allocation9], %s521
        // Predicated region
        $region53: #{tpu_custom_call.1} parent=31 // pred_check
          %p523 = pneg %p144
        $region54: #{tpu_custom_call.1} parent=31 // pred_check_branch
          %525 = sbr.rel (%p523) target = $region56
        $region55: #{tpu_custom_call.1} parent=31 // pred_region
          %s526 = smul.u32 16, %s28
          %528 = vsyncadd %s519, 0
          %s529 = smul.addr %s526, 2
          %s530 = sadd.s32 %s29, %s529
          %s531 = smul.addr %s530, 8
          %s532 = scalar_lea.hbm %s3, %s531
          %s533 = sshll.u32 %s522, 4
          %s534 = int_to_ptr.vmem [resolvable:$true] %s533
          %s535 = sshll.u32 %s532, 4
          %s536 = int_to_ptr.hbm [resolvable:$true] %s535
          %541 = dma.vmem_to_hbm [thread:$0]  %s534, 2048, %s536, %s519, 128, 256, 8
        $region56: #{tpu_custom_call.1} parent=31 // pred_fallthru
          _
      $region32: #{tpu_custom_call.1} parent=5 // pred_fallthru
        _
      %p542 = scmp.le.s32.totalorder 2, %s18
      // Predicated region
      $region57: #{tpu_custom_call.1} parent=5 // pred_check
        %p543 = pneg %p542
      $region58: #{tpu_custom_call.1} parent=5 // pred_check_branch
        %545 = sbr.rel (%p543) target = $region60
      $region59: #{tpu_custom_call.1} parent=5 // pred_region
        %s546 = ssub.s32 %s18, 2
        // Predicated region
        $region61: #{tpu_custom_call.1} parent=59 // pred_check
          %p547 = pneg %p150
        $region62: #{tpu_custom_call.1} parent=59 // pred_check_branch
          %549 = sbr.rel (%p547) target = $region64
        $region63: #{tpu_custom_call.1} parent=59 // pred_region
          %s550 = sand.u32 %s135, 1
          %s551 = scalar_lea.sflag [#allocation5], %s550
          %s552 = sand.u32 %s135, 1
          %s553 = smul.addr %s552, 128
          %s554 = scalar_lea.vmem [#allocation9], %s553
          %556 = dma.done %s551, 2048
        $region64: #{tpu_custom_call.1} parent=59 // pred_fallthru
          _
      $region60: #{tpu_custom_call.1} parent=5 // pred_fallthru
        _
    $region6: #{tpu_custom_call.1} parent=1 // loop_footer
      %s22 = sadd.s32 1, %s18
    $region7: #{tpu_custom_call.1} parent=1 // loop_footer_branch
      %17 = sbr.rel target = $region3
    $region8: #{tpu_custom_call.1} parent=1 // loop_exit
      _
    %557 = vsyncpa [#allocation4], 1
    %s558 = scalar_lea.sflag [#allocation4], 1
    %559 = vsyncpa %s558, 1
    %560 = vsyncpa [#allocation7], 1
    %s561 = scalar_lea.sflag [#allocation7], 1
    %562 = vsyncpa %s561, 1
    %563 = vsyncpa [#allocation5], 1
    %s564 = scalar_lea.sflag [#allocation5], 1
    %565 = vsyncpa %s564, 1

</llo_original>
